<compile_context>
chip_gen: v7x
topology: tpu7x:2x2x1
jax: 0.10.0
libtpu: 0.0.40
codegen_flags: <defaults>
</compile_context>

<pallas_src>
import functools

import jax
import jax.numpy as jnp
from jax import lax
from jax.experimental import pallas as pl
from jax.experimental.pallas import tpu as pltpu


def _layer_norm(x, w, b, eps=1e-5):
    # x: (N, E); w, b: (1, E).  PyTorch LayerNorm over last dim (biased variance), f32 math.
    mu = jnp.mean(x, axis=-1, keepdims=True)
    var = jnp.mean((x - mu) ** 2, axis=-1, keepdims=True)
    return (x - mu) * lax.rsqrt(var + eps) * w + b


def _div_iota(x, d):
    # d is a compile-time Python int; powers of two lower to a single shift (cheap VPU op).
    return (x >> (d.bit_length() - 1)) if d & (d - 1) == 0 else x // d


def _mod_iota(x, d):
    return (x & (d - 1)) if d & (d - 1) == 0 else x % d


def _transformer_block_kernel(
    kq_ref,     # (2*N*L, Dh) f32   [key rows ; query rows], row n*L+l = x[n, l, :]
    v_ref,      # (N*L, Dh)   f32   value rows, natural layout (no wrapper tiling)
    qflat_ref,  # (N, E)      f32   query.reshape(N, E) for the residual
    wkq_ref,    # (Dh, 2P)    f32   [wk ; wq] pre-transposed to (in, out)
    wfc_ref,    # (E, E)      bf16  fc_out weight, pre-transposed to (in, out)
    w1_ref,     # (E, H)      bf16  FFN weight 1, pre-transposed to (in, out)
    w2_ref,     # (H, E)      bf16  FFN weight 2, pre-transposed to (in, out)
    b1_ref,     # (1, H)      f32
    vec_ref,    # (6, E)      f32   packed [bfc; ln1w; ln1b; b2; ln2w; ln2b]
    out_ref,    # (N, E)      f32
    *,
    heads,
    head_dim,
    proj_d,
):
    N, E = out_ref.shape
    L, Dh, P = heads, head_dim, proj_d
    NL = N * L
    f32 = jnp.float32
    inv_sqrt_e = 1.0 / (float(E) ** 0.5)

    vec = vec_ref[...]
    bfc, ln1w, ln1b = vec[0:1], vec[1:2], vec[2:3]
    b2, ln2w, ln2b = vec[3:4], vec[4:5], vec[5:6]

    # --- fused K/Q projection: one MXU op, weight already in (in, out) layout ---
    proj = jnp.dot(kq_ref[...], wkq_ref[...], preferred_element_type=f32)   # (2*N*L, 2P)
    kp = proj[:NL, :P]     # key rows   @ wk.T
    qp = proj[NL:, P:]     # query rows @ wq.T

    # --- block-masked attention over all N*L rows at once (cross-batch entries -> -inf) ---
    energy = lax.dot_general(qp, kp, (((1,), (1,)), ((), ())),
                             preferred_element_type=f32) * inv_sqrt_e        # (N*L, N*L)
    row_b = _div_iota(lax.broadcasted_iota(jnp.int32, (NL, NL), 0), L)
    col_b = _div_iota(lax.broadcasted_iota(jnp.int32, (NL, NL), 1), L)
    # -1e30 is safe here: every row keeps L unmasked entries so the row max stays finite and
    # exp(-1e30 - m) underflows to exactly 0.
    energy = jnp.where(row_b == col_b, energy, -1e30)
    m = jnp.max(energy, axis=-1, keepdims=True)
    p = jnp.exp(energy - m)
    attn = p / jnp.sum(p, axis=-1, keepdims=True)   # exact reciprocal (accuracy)

    # --- attention x values, head-block lane placement (constant 0/1 matmul) and per-batch
    #     row reduction -> flattened (N, E) attention output with no in-kernel reshape ---
    av = jnp.dot(attn, v_ref[...], preferred_element_type=f32)               # (N*L, Dh)
    rep = (_mod_iota(lax.broadcasted_iota(jnp.int32, (Dh, E), 1), Dh)
           == lax.broadcasted_iota(jnp.int32, (Dh, E), 0)).astype(f32)       # (Dh, E)
    av_wide = jnp.dot(av, rep, preferred_element_type=f32)                   # (N*L, E)
    sel = (_div_iota(lax.broadcasted_iota(jnp.int32, (NL, E), 1), Dh)
           == _mod_iota(lax.broadcasted_iota(jnp.int32, (NL, E), 0), L)).astype(f32)
    gsum = (lax.broadcasted_iota(jnp.int32, (N, NL), 0)
            == _div_iota(lax.broadcasted_iota(jnp.int32, (N, NL), 1), L)).astype(f32)
    av_flat = jnp.dot(gsum, av_wide * sel, preferred_element_type=f32)       # (N, E)

    # --- fc_out (bf16 MXU, f32 accum, no weight relayout), residual + LayerNorm 1 ---
    fc = jnp.dot(av_flat.astype(jnp.bfloat16), wfc_ref[...],
                 preferred_element_type=f32) + bfc
    x1 = _layer_norm(fc + qflat_ref[...], ln1w, ln1b)

    # --- feed-forward: Linear -> ReLU -> Linear (bf16 MXU, f32 accum) ---
    h = jnp.maximum(jnp.dot(x1.astype(jnp.bfloat16), w1_ref[...],
                            preferred_element_type=f32) + b1_ref[...], 0.0)
    ff = jnp.dot(h.astype(jnp.bfloat16), w2_ref[...],
                 preferred_element_type=f32) + b2

    # --- residual + LayerNorm 2, single lane-dense (N, E) store ---
    out_ref[...] = _layer_norm(ff + x1, ln2w, ln2b)


def prepare_params(params):
    """One-time parameter prep (run ONCE, not per forward): fuse + transpose + cast + pack."""
    return {
        "w_kq_t": jnp.concatenate([params["wk"], params["wq"]], axis=0).T,   # (Dh, 2P) f32
        "wfc_t": params["wfc"].T.astype(jnp.bfloat16),                        # (E, E)
        "w1_t": params["w1"].T.astype(jnp.bfloat16),                          # (E, H)
        "w2_t": params["w2"].T.astype(jnp.bfloat16),                          # (H, E)
        "b1": params["b1"],                                                    # (1, H) f32
        "vecs": jnp.concatenate(
            [params["bfc"], params["ln1w"], params["ln1b"],
             params["b2"], params["ln2w"], params["ln2b"]], axis=0),           # (6, E) f32
    }


@functools.partial(jax.jit, static_argnames=("heads", "head_dim"))
def transformer_block_pallas(prepped, value, key, query, *, heads, head_dim):
    N, L, Dh = query.shape
    assert L == heads and Dh == head_dim, "module requires seq_len == heads"
    E = heads * head_dim
    H = prepped["w1_t"].shape[1]
    P = prepped["w_kq_t"].shape[1] // 2
    NL = N * L

    # Per-call glue is only trivial row-flattens of the activations (fused under jit).
    kq_rows = jnp.concatenate(
        [key.reshape(NL, Dh), query.reshape(NL, Dh)], axis=0)   # (2*N*L, Dh)
    v_rows = value.reshape(NL, Dh)                              # (N*L, Dh)
    q_flat = query.reshape(N, E)                                # (N, E)

    flops = 2 * (
        2 * NL * Dh * 2 * P      # fused K/Q projection
        + NL * P * NL            # energy
        + NL * Dh * NL           # attn @ v
        + NL * Dh * E            # head-block lane placement
        + N * NL * E             # per-batch row reduction
        + N * E * E              # fc_out
        + N * E * H + N * H * E  # feed-forward
    )
    bytes_accessed = (
        4 * (kq_rows.size + v_rows.size + q_flat.size + prepped["w_kq_t"].size
             + prepped["b1"].size + prepped["vecs"].size + N * E)
        + 2 * (prepped["wfc_t"].size + prepped["w1_t"].size + prepped["w2_t"].size)
    )
    cost = pl.CostEstimate(flops=flops, transcendentals=NL * NL + 4 * N,
                           bytes_accessed=bytes_accessed)

    vmem = pl.BlockSpec(memory_space=pltpu.MemorySpace.VMEM)
    kernel = functools.partial(
        _transformer_block_kernel, heads=heads, head_dim=head_dim, proj_d=P)
    return pl.pallas_call(
        kernel,
        out_shape=jax.ShapeDtypeStruct((N, E), jnp.float32),
        in_specs=[vmem] * 9,
        out_specs=vmem,
        cost_estimate=cost,
    )(kq_rows, v_rows, q_flat, prepped["w_kq_t"], prepped["wfc_t"],
      prepped["w1_t"], prepped["w2_t"], prepped["b1"], prepped["vecs"])


def init_params(key, head_dim, heads, forward_expansion):
    E = head_dim * heads
    H = forward_expansion * E
    P = 6  # proj_d in the PyTorch module
    ks = jax.random.split(key, 10)
    s = 0.05
    f32 = jnp.float32
    return {
        "wk": jax.random.normal(ks[0], (P, head_dim), f32) * s,
        "wq": jax.random.normal(ks[1], (P, head_dim), f32) * s,
        "wfc": jax.random.normal(ks[2], (E, E), f32) * s,
        "bfc": jax.random.normal(ks[3], (1, E), f32) * s,
        "ln1w": 1.0 + jax.random.normal(ks[4], (1, E), f32) * 0.01,
        "ln1b": jax.random.normal(ks[5], (1, E), f32) * 0.01,
        "w1": jax.random.normal(ks[6], (H, E), f32) * s,
        "b1": jax.random.normal(ks[7], (1, H), f32) * s,
        "w2": jax.random.normal(ks[8], (E, H), f32) * s,
        "b2": jax.random.normal(ks[9], (1, E), f32) * s,
        "ln2w": jnp.ones((1, E), f32),
        "ln2b": jnp.zeros((1, E), f32),
    }


def reference(params, value, key, query, heads, head_dim):
    # Pure-JAX f32 mirror of the PyTorch forward, for a numerical sanity check.
    N, L, Dh = query.shape
    E = heads * head_dim
    eps = 1e-5

    def ln(x, w, b):
        mu = jnp.mean(x, axis=-1, keepdims=True)
        var = jnp.mean((x - mu) ** 2, axis=-1, keepdims=True)
        return (x - mu) / jnp.sqrt(var + eps) * w + b

    kp = jnp.einsum("nld,pd->nlp", key, params["wk"])
    qp = jnp.einsum("nld,pd->nlp", query, params["wq"])
    energy = jnp.einsum("nqp,nkp->nqk", qp, kp) / (E ** 0.5)
    attn = jax.nn.softmax(energy, axis=2)
    out = jnp.einsum("nqk,nkh->nqh", attn, value).reshape(N, E)
    out = out @ params["wfc"].T + params["bfc"]
    x = ln(out + query.reshape(N, E), params["ln1w"], params["ln1b"])
    h = jnp.maximum(x @ params["w1"].T + params["b1"], 0.0)
    ff = h @ params["w2"].T + params["b2"]
    return ln(ff + x, params["ln2w"], params["ln2b"])


if __name__ == "__main__":
    head_dim, heads, forward_expansion = 16, 8, 2  # embed_size = 128, hidden = 256
    N = 2
    seq = heads  # module's reshape requires query_len == heads

    root = jax.random.PRNGKey(0)
    kp_, kv_, kk_, kq_ = jax.random.split(root, 4)
    params = init_params(kp_, head_dim, heads, forward_expansion)
    value = jax.random.normal(kv_, (N, seq, head_dim), jnp.float32)
    key = jax.random.normal(kk_, (N, seq, head_dim), jnp.float32)
    query = jax.random.normal(kq_, (N, seq, head_dim), jnp.float32)

    prepped = prepare_params(params)  # one-time weight prep, hoisted out of the forward path
    out = transformer_block_pallas(prepped, value, key, query,
                                   heads=heads, head_dim=head_dim)
    out = jax.block_until_ready(out)

    ref = reference(params, value, key, query, heads, head_dim)
    assert out.shape == (N, heads * head_dim)
    # bf16 MXU weights (f32 accumulation) -> looser tolerance than an all-f32 variant.
    assert jnp.allclose(out, ref, atol=3e-2, rtol=3e-2), "mismatch vs pure-JAX reference"

    print("KERNEL_OK")
</pallas_src>

<mosaic_0001>
module attributes {stable_mosaic.version = 11 : i64} {
  func.func @_transformer_block_kernel(%arg0: memref<32x16xf32, #tpu.memory_space<vmem>>, %arg1: memref<16x16xf32, #tpu.memory_space<vmem>>, %arg2: memref<2x128xf32, #tpu.memory_space<vmem>>, %arg3: memref<16x12xf32, #tpu.memory_space<vmem>>, %arg4: memref<128x128xbf16, #tpu.memory_space<vmem>>, %arg5: memref<128x256xbf16, #tpu.memory_space<vmem>>, %arg6: memref<256x128xbf16, #tpu.memory_space<vmem>>, %arg7: memref<1x256xf32, #tpu.memory_space<vmem>>, %arg8: memref<6x128xf32, #tpu.memory_space<vmem>>, %arg9: memref<2x128xf32, #tpu.memory_space<vmem>>) attributes {dimension_semantics = [], scalar_prefetch = 0 : i64, scratch_operands = 0 : i64, tpu.core_type = #tpu.core_type<tc>} {
    %c0 = arith.constant 0 : index
    %c0_0 = arith.constant 0 : index
    %0 = vector.load %arg8[%c0, %c0_0] : memref<6x128xf32, #tpu.memory_space<vmem>>, vector<6x128xf32>
    %1 = vector.extract_strided_slice %0 {offsets = [0, 0], sizes = [1, 128], strides = [1, 1]} : vector<6x128xf32> to vector<1x128xf32>
    %2 = vector.extract_strided_slice %0 {offsets = [1, 0], sizes = [1, 128], strides = [1, 1]} : vector<6x128xf32> to vector<1x128xf32>
    %3 = vector.extract_strided_slice %0 {offsets = [2, 0], sizes = [1, 128], strides = [1, 1]} : vector<6x128xf32> to vector<1x128xf32>
    %4 = vector.extract_strided_slice %0 {offsets = [3, 0], sizes = [1, 128], strides = [1, 1]} : vector<6x128xf32> to vector<1x128xf32>
    %5 = vector.extract_strided_slice %0 {offsets = [4, 0], sizes = [1, 128], strides = [1, 1]} : vector<6x128xf32> to vector<1x128xf32>
    %6 = vector.extract_strided_slice %0 {offsets = [5, 0], sizes = [1, 128], strides = [1, 1]} : vector<6x128xf32> to vector<1x128xf32>
    %c0_1 = arith.constant 0 : index
    %c0_2 = arith.constant 0 : index
    %7 = vector.load %arg0[%c0_1, %c0_2] : memref<32x16xf32, #tpu.memory_space<vmem>>, vector<32x16xf32>
    %c0_3 = arith.constant 0 : index
    %c0_4 = arith.constant 0 : index
    %8 = vector.load %arg3[%c0_3, %c0_4] : memref<16x12xf32, #tpu.memory_space<vmem>>, vector<16x12xf32>
    %cst = arith.constant dense<0.000000e+00> : vector<32x12xf32>
    %9 = tpu.matmul %7, %8, %cst {dimension_numbers = #tpu.dot_dimension_numbers<[1], [0], [0], [1], [0, 0, 1, 1], [], []>} : vector<32x16xf32>, vector<16x12xf32>, vector<32x12xf32> -> vector<32x12xf32>
    %10 = vector.extract_strided_slice %9 {offsets = [0, 0], sizes = [16, 6], strides = [1, 1]} : vector<32x12xf32> to vector<16x6xf32>
    %11 = vector.extract_strided_slice %9 {offsets = [16, 6], sizes = [16, 6], strides = [1, 1]} : vector<32x12xf32> to vector<16x6xf32>
    %cst_5 = arith.constant dense<0.000000e+00> : vector<16x16xf32>
    %12 = tpu.matmul %11, %10, %cst_5 {dimension_numbers = #tpu.dot_dimension_numbers<[1], [1], [0], [0], [0, 0, 1, 0], [], []>} : vector<16x6xf32>, vector<16x6xf32>, vector<16x16xf32> -> vector<16x16xf32>
    %cst_6 = arith.constant 0.0883883461 : f32
    %13 = vector.broadcast %cst_6 : f32 to vector<16x16xf32>
    %14 = arith.mulf %12, %13 : vector<16x16xf32>
    %15 = tpu.iota {dimensions = array<i32: 0>} : vector<16x16xi32>
    %c3_i32 = arith.constant 3 : i32
    %16 = vector.broadcast %c3_i32 : i32 to vector<16x16xi32>
    %17 = arith.shrsi %15, %16 : vector<16x16xi32>
    %18 = tpu.iota {dimensions = array<i32: 1>} : vector<16x16xi32>
    %c3_i32_7 = arith.constant 3 : i32
    %19 = vector.broadcast %c3_i32_7 : i32 to vector<16x16xi32>
    %20 = arith.shrsi %18, %19 : vector<16x16xi32>
    %21 = arith.cmpi eq, %17, %20 : vector<16x16xi32>
    %cst_8 = arith.constant -1.000000e+30 : f32
    %22 = vector.broadcast %cst_8 : f32 to vector<16x16xf32>
    %23 = arith.select %21, %14, %22 : vector<16x16xi1>, vector<16x16xf32>
    %cst_9 = arith.constant dense<0xFF800000> : vector<16xf32>
    %24 = vector.multi_reduction <maximumf>, %23, %cst_9 [1] : vector<16x16xf32> to vector<16xf32>
    %25 = vector.shape_cast %24 : vector<16xf32> to vector<16x1xf32>
    %26 = vector.broadcast %25 : vector<16x1xf32> to vector<16x16xf32>
    %27 = arith.subf %23, %26 : vector<16x16xf32>
    %28 = math.exp %27 : vector<16x16xf32>
    %cst_10 = arith.constant dense<0.000000e+00> : vector<16xf32>
    %29 = vector.multi_reduction <add>, %28, %cst_10 [1] : vector<16x16xf32> to vector<16xf32>
    %30 = vector.shape_cast %29 : vector<16xf32> to vector<16x1xf32>
    %31 = vector.broadcast %30 : vector<16x1xf32> to vector<16x16xf32>
    %32 = arith.divf %28, %31 : vector<16x16xf32>
    %c0_11 = arith.constant 0 : index
    %c0_12 = arith.constant 0 : index
    %33 = vector.load %arg1[%c0_11, %c0_12] : memref<16x16xf32, #tpu.memory_space<vmem>>, vector<16x16xf32>
    %cst_13 = arith.constant dense<0.000000e+00> : vector<16x16xf32>
    %34 = tpu.matmul %32, %33, %cst_13 {dimension_numbers = #tpu.dot_dimension_numbers<[1], [0], [0], [1], [0, 0, 1, 1], [], []>} : vector<16x16xf32>, vector<16x16xf32>, vector<16x16xf32> -> vector<16x16xf32>
    %35 = tpu.iota {dimensions = array<i32: 1>} : vector<16x128xi32>
    %c15_i32 = arith.constant 15 : i32
    %36 = vector.broadcast %c15_i32 : i32 to vector<16x128xi32>
    %37 = arith.andi %35, %36 : vector<16x128xi32>
    %38 = tpu.iota {dimensions = array<i32: 0>} : vector<16x128xi32>
    %39 = arith.cmpi eq, %37, %38 : vector<16x128xi32>
    %40 = arith.extui %39 : vector<16x128xi1> to vector<16x128xi32>
    %41 = arith.sitofp %40 : vector<16x128xi32> to vector<16x128xf32>
    %cst_14 = arith.constant dense<0.000000e+00> : vector<16x128xf32>
    %42 = tpu.matmul %34, %41, %cst_14 {dimension_numbers = #tpu.dot_dimension_numbers<[1], [0], [0], [1], [0, 0, 1, 1], [], []>} : vector<16x16xf32>, vector<16x128xf32>, vector<16x128xf32> -> vector<16x128xf32>
    %43 = tpu.iota {dimensions = array<i32: 1>} : vector<16x128xi32>
    %c4_i32 = arith.constant 4 : i32
    %44 = vector.broadcast %c4_i32 : i32 to vector<16x128xi32>
    %45 = arith.shrsi %43, %44 : vector<16x128xi32>
    %46 = tpu.iota {dimensions = array<i32: 0>} : vector<16x128xi32>
    %c7_i32 = arith.constant 7 : i32
    %47 = vector.broadcast %c7_i32 : i32 to vector<16x128xi32>
    %48 = arith.andi %46, %47 : vector<16x128xi32>
    %49 = arith.cmpi eq, %45, %48 : vector<16x128xi32>
    %50 = arith.extui %49 : vector<16x128xi1> to vector<16x128xi32>
    %51 = arith.sitofp %50 : vector<16x128xi32> to vector<16x128xf32>
    %52 = tpu.iota {dimensions = array<i32: 0>} : vector<2x16xi32>
    %53 = tpu.iota {dimensions = array<i32: 1>} : vector<2x16xi32>
    %c3_i32_15 = arith.constant 3 : i32
    %54 = vector.broadcast %c3_i32_15 : i32 to vector<2x16xi32>
    %55 = arith.shrsi %53, %54 : vector<2x16xi32>
    %56 = arith.cmpi eq, %52, %55 : vector<2x16xi32>
    %57 = arith.extui %56 : vector<2x16xi1> to vector<2x16xi32>
    %58 = arith.sitofp %57 : vector<2x16xi32> to vector<2x16xf32>
    %59 = arith.mulf %42, %51 : vector<16x128xf32>
    %cst_16 = arith.constant dense<0.000000e+00> : vector<2x128xf32>
    %60 = tpu.matmul %58, %59, %cst_16 {dimension_numbers = #tpu.dot_dimension_numbers<[1], [0], [0], [1], [0, 0, 1, 1], [], []>} : vector<2x16xf32>, vector<16x128xf32>, vector<2x128xf32> -> vector<2x128xf32>
    %61 = arith.truncf %60 : vector<2x128xf32> to vector<2x128xbf16>
    %c0_17 = arith.constant 0 : index
    %c0_18 = arith.constant 0 : index
    %62 = vector.load %arg4[%c0_17, %c0_18] : memref<128x128xbf16, #tpu.memory_space<vmem>>, vector<128x128xbf16>
    %cst_19 = arith.constant dense<0.000000e+00> : vector<2x128xf32>
    %63 = tpu.matmul %61, %62, %cst_19 {dimension_numbers = #tpu.dot_dimension_numbers<[1], [0], [0], [1], [0, 0, 1, 1], [], []>} : vector<2x128xbf16>, vector<128x128xbf16>, vector<2x128xf32> -> vector<2x128xf32>
    %64 = vector.broadcast %1 : vector<1x128xf32> to vector<2x128xf32>
    %65 = arith.addf %63, %64 : vector<2x128xf32>
    %c0_20 = arith.constant 0 : index
    %c0_21 = arith.constant 0 : index
    %66 = vector.load %arg2[%c0_20, %c0_21] : memref<2x128xf32, #tpu.memory_space<vmem>>, vector<2x128xf32>
    %67 = arith.addf %65, %66 : vector<2x128xf32>
    %cst_22 = arith.constant dense<0.000000e+00> : vector<2xf32>
    %68 = vector.multi_reduction <add>, %67, %cst_22 [1] : vector<2x128xf32> to vector<2xf32>
    %69 = vector.shape_cast %68 : vector<2xf32> to vector<2x1xf32>
    %cst_23 = arith.constant 1.280000e+02 : f32
    %70 = vector.broadcast %cst_23 : f32 to vector<2x1xf32>
    %71 = arith.divf %69, %70 : vector<2x1xf32>
    %72 = vector.broadcast %71 : vector<2x1xf32> to vector<2x128xf32>
    %73 = arith.subf %67, %72 : vector<2x128xf32>
    %74 = arith.mulf %73, %73 : vector<2x128xf32>
    %cst_24 = arith.constant dense<0.000000e+00> : vector<2xf32>
    %75 = vector.multi_reduction <add>, %74, %cst_24 [1] : vector<2x128xf32> to vector<2xf32>
    %76 = vector.shape_cast %75 : vector<2xf32> to vector<2x1xf32>
    %cst_25 = arith.constant 1.280000e+02 : f32
    %77 = vector.broadcast %cst_25 : f32 to vector<2x1xf32>
    %78 = arith.divf %76, %77 : vector<2x1xf32>
    %79 = vector.broadcast %71 : vector<2x1xf32> to vector<2x128xf32>
    %80 = arith.subf %67, %79 : vector<2x128xf32>
    %cst_26 = arith.constant 9.99999974E-6 : f32
    %81 = vector.broadcast %cst_26 : f32 to vector<2x1xf32>
    %82 = arith.addf %78, %81 : vector<2x1xf32>
    %83 = math.rsqrt %82 : vector<2x1xf32>
    %84 = vector.broadcast %83 : vector<2x1xf32> to vector<2x128xf32>
    %85 = arith.mulf %80, %84 : vector<2x128xf32>
    %86 = vector.broadcast %2 : vector<1x128xf32> to vector<2x128xf32>
    %87 = arith.mulf %85, %86 : vector<2x128xf32>
    %88 = vector.broadcast %3 : vector<1x128xf32> to vector<2x128xf32>
    %89 = arith.addf %87, %88 : vector<2x128xf32>
    %90 = arith.truncf %89 : vector<2x128xf32> to vector<2x128xbf16>
    %c0_27 = arith.constant 0 : index
    %c0_28 = arith.constant 0 : index
    %91 = vector.load %arg5[%c0_27, %c0_28] : memref<128x256xbf16, #tpu.memory_space<vmem>>, vector<128x256xbf16>
    %cst_29 = arith.constant dense<0.000000e+00> : vector<2x256xf32>
    %92 = tpu.matmul %90, %91, %cst_29 {dimension_numbers = #tpu.dot_dimension_numbers<[1], [0], [0], [1], [0, 0, 1, 1], [], []>} : vector<2x128xbf16>, vector<128x256xbf16>, vector<2x256xf32> -> vector<2x256xf32>
    %c0_30 = arith.constant 0 : index
    %c0_31 = arith.constant 0 : index
    %93 = vector.load %arg7[%c0_30, %c0_31] : memref<1x256xf32, #tpu.memory_space<vmem>>, vector<1x256xf32>
    %94 = vector.broadcast %93 : vector<1x256xf32> to vector<2x256xf32>
    %95 = arith.addf %92, %94 : vector<2x256xf32>
    %cst_32 = arith.constant 0.000000e+00 : f32
    %96 = vector.broadcast %cst_32 : f32 to vector<2x256xf32>
    %97 = arith.maximumf %95, %96 : vector<2x256xf32>
    %98 = arith.truncf %97 : vector<2x256xf32> to vector<2x256xbf16>
    %c0_33 = arith.constant 0 : index
    %c0_34 = arith.constant 0 : index
    %99 = vector.load %arg6[%c0_33, %c0_34] : memref<256x128xbf16, #tpu.memory_space<vmem>>, vector<256x128xbf16>
    %cst_35 = arith.constant dense<0.000000e+00> : vector<2x128xf32>
    %100 = tpu.matmul %98, %99, %cst_35 {dimension_numbers = #tpu.dot_dimension_numbers<[1], [0], [0], [1], [0, 0, 1, 1], [], []>} : vector<2x256xbf16>, vector<256x128xbf16>, vector<2x128xf32> -> vector<2x128xf32>
    %101 = vector.broadcast %4 : vector<1x128xf32> to vector<2x128xf32>
    %102 = arith.addf %100, %101 : vector<2x128xf32>
    %103 = arith.addf %102, %89 : vector<2x128xf32>
    %cst_36 = arith.constant dense<0.000000e+00> : vector<2xf32>
    %104 = vector.multi_reduction <add>, %103, %cst_36 [1] : vector<2x128xf32> to vector<2xf32>
    %105 = vector.shape_cast %104 : vector<2xf32> to vector<2x1xf32>
    %cst_37 = arith.constant 1.280000e+02 : f32
    %106 = vector.broadcast %cst_37 : f32 to vector<2x1xf32>
    %107 = arith.divf %105, %106 : vector<2x1xf32>
    %108 = vector.broadcast %107 : vector<2x1xf32> to vector<2x128xf32>
    %109 = arith.subf %103, %108 : vector<2x128xf32>
    %110 = arith.mulf %109, %109 : vector<2x128xf32>
    %cst_38 = arith.constant dense<0.000000e+00> : vector<2xf32>
    %111 = vector.multi_reduction <add>, %110, %cst_38 [1] : vector<2x128xf32> to vector<2xf32>
    %112 = vector.shape_cast %111 : vector<2xf32> to vector<2x1xf32>
    %cst_39 = arith.constant 1.280000e+02 : f32
    %113 = vector.broadcast %cst_39 : f32 to vector<2x1xf32>
    %114 = arith.divf %112, %113 : vector<2x1xf32>
    %115 = vector.broadcast %107 : vector<2x1xf32> to vector<2x128xf32>
    %116 = arith.subf %103, %115 : vector<2x128xf32>
    %cst_40 = arith.constant 9.99999974E-6 : f32
    %117 = vector.broadcast %cst_40 : f32 to vector<2x1xf32>
    %118 = arith.addf %114, %117 : vector<2x1xf32>
    %119 = math.rsqrt %118 : vector<2x1xf32>
    %120 = vector.broadcast %119 : vector<2x1xf32> to vector<2x128xf32>
    %121 = arith.mulf %116, %120 : vector<2x128xf32>
    %122 = vector.broadcast %5 : vector<1x128xf32> to vector<2x128xf32>
    %123 = arith.mulf %121, %122 : vector<2x128xf32>
    %124 = vector.broadcast %6 : vector<1x128xf32> to vector<2x128xf32>
    %125 = arith.addf %123, %124 : vector<2x128xf32>
    %c0_41 = arith.constant 0 : index
    %c0_42 = arith.constant 0 : index
    %126 = vector.load %arg9[%c0_41, %c0_42] : memref<2x128xf32, #tpu.memory_space<vmem>>, vector<2x128xf32>
    tpu.vector_store %arg9[%c0_41, %c0_42], %125 {strides = array<i32>} : memref<2x128xf32, #tpu.memory_space<vmem>>, vector<2x128xf32>,
    return
  }
}

</mosaic_0001>

<llo_original>
// kernel: transformer_block_pallas.1
$region0: #{transformer_block_pallas.1}
  #allocation0 [shape = 'u32[]', space=smem, size = 0x4, offset = 0x4, fixed_abs, tag = 'smem constant byte address 0x4 - core index']
  #allocation1 [shape = 'u32[144,128]{1,0:T(1,128)}', space=vmem, size = 0x12000, scoped, tag = 'internal scratch']
  %s0 = inlined_call_operand.vmem [shape: f32[32,16], index: 0, kind: input, shape index: {}]
  %s1 = inlined_call_operand.vmem [shape: f32[16,16], index: 1, kind: input, shape index: {}]
  %s2 = inlined_call_operand.vmem [shape: f32[2,128], index: 2, kind: input, shape index: {}]
  %s3 = inlined_call_operand.vmem [shape: f32[16,12], index: 3, kind: input, shape index: {}]
  %s4 = inlined_call_operand.vmem [shape: bf16[128,128], index: 4, kind: input, shape index: {}]
  %s5 = inlined_call_operand.hbm [shape: bf16[128,256], index: 5, kind: input, shape index: {}]
  %s6 = inlined_call_operand.hbm [shape: bf16[256,128], index: 6, kind: input, shape index: {}]
  %s7 = inlined_call_operand.vmem [shape: f32[1,256], index: 7, kind: input, shape index: {}]
  %s8 = inlined_call_operand.hbm [shape: f32[6,128], index: 8, kind: input, shape index: {}]
  %s9 = inlined_call_operand.hbm [shape: f32[2,128], index: 9, kind: output, shape index: {}]
  %s10 = sld [smem:[#allocation0]]
  $region58: #{transformer_block_pallas.1} parent=0
    _
  %s12 = ssub.s32 1, %s10
  %s13 = scalar_select 0, %s12, %s10
  $region1: #{transformer_block_pallas.1} parent=0
    #allocation2 [shape = 'u8[65536]{0}', space=vmem, size = 0x10000, scoped, tag = 'input window, operand 5, single buffered']
    #allocation3 [shape = 's32[1]{0}', space=sflag, size = 0x4, scoped, tag = 'scoped memory for transformer_block_pallas.1']
    #allocation4 [shape = 's32[1]{0}', space=sflag, size = 0x4, scoped, tag = 'scoped memory for transformer_block_pallas.1']
    #allocation5 [shape = 'u8[65536]{0}', space=vmem, size = 0x10000, scoped, tag = 'input window, operand 6, single buffered']
    #allocation6 [shape = 's32[1]{0}', space=sflag, size = 0x4, scoped, tag = 'scoped memory for transformer_block_pallas.1']
    #allocation7 [shape = 'u8[4096]{0}', space=vmem, size = 0x1000, scoped, tag = 'input window, operand 8, single buffered']
    #allocation8 [shape = 'u8[1024]{0}', space=vmem, size = 0x400, scoped, tag = 'output window, operand 0, single buffered']
    %14 = vsyncpa [#allocation3], 0
    %15 = vsyncpa [#allocation6], 0
    %16 = vsyncpa [#allocation4], 0
    // Predicated region
    $region2: #{transformer_block_pallas.1} parent=1 // pred_check
      _
    $region3: #{transformer_block_pallas.1} parent=1 // pred_check_branch
      %18 = sbr.rel (0) target = $region5
    $region4: #{transformer_block_pallas.1} parent=1 // pred_region
      _
    $region5: #{transformer_block_pallas.1} parent=1 // pred_fallthru
      _
    // Predicated region
    $region6: #{transformer_block_pallas.1} parent=1 // pred_check
      _
    $region7: #{transformer_block_pallas.1} parent=1 // pred_check_branch
      %20 = sbr.rel (0) target = $region9
    $region8: #{transformer_block_pallas.1} parent=1 // pred_region
      _
    $region9: #{transformer_block_pallas.1} parent=1 // pred_fallthru
      _
    // Predicated region
    $region10: #{transformer_block_pallas.1} parent=1 // pred_check
      _
    $region11: #{transformer_block_pallas.1} parent=1 // pred_check_branch
      %22 = sbr.rel (0) target = $region13
    $region12: #{transformer_block_pallas.1} parent=1 // pred_region
      _
    $region13: #{transformer_block_pallas.1} parent=1 // pred_fallthru
      _
    // Predicated region
    $region14: #{transformer_block_pallas.1} parent=1 // pred_check
      _
    $region15: #{transformer_block_pallas.1} parent=1 // pred_check_branch
      %24 = sbr.rel (0) target = $region17
    $region16: #{transformer_block_pallas.1} parent=1 // pred_region
      _
    $region17: #{transformer_block_pallas.1} parent=1 // pred_fallthru
      _
    // Predicated region
    $region18: #{transformer_block_pallas.1} parent=1 // pred_check
      _
    $region19: #{transformer_block_pallas.1} parent=1 // pred_check_branch
      %26 = sbr.rel (0) target = $region21
    $region20: #{transformer_block_pallas.1} parent=1 // pred_region
      _
    $region21: #{transformer_block_pallas.1} parent=1 // pred_fallthru
      _
    // Predicated region
    $region22: #{transformer_block_pallas.1} parent=1 // pred_check
      _
    $region23: #{transformer_block_pallas.1} parent=1 // pred_check_branch
      %28 = sbr.rel (0) target = $region25
    $region24: #{transformer_block_pallas.1} parent=1 // pred_region
      %s30 = ssub.s32 2048, 2048
      %31 = vsyncadd [#allocation3], %s30
      %s32 = sshll.u32 [#allocation2], 4
      %s33 = int_to_ptr.vmem [resolvable:$true] %s32
      %38 = dma.hbm_to_vmem [thread:$0]  %s5, 2048, %s33, [#allocation3], 128, 128, 8
    $region25: #{transformer_block_pallas.1} parent=1 // pred_fallthru
      _
    // Predicated region
    $region26: #{transformer_block_pallas.1} parent=1 // pred_check
      _
    $region27: #{transformer_block_pallas.1} parent=1 // pred_check_branch
      %40 = sbr.rel (0) target = $region29
    $region28: #{transformer_block_pallas.1} parent=1 // pred_region
      %s42 = ssub.s32 2048, 2048
      %43 = vsyncadd [#allocation6], %s42
      %s44 = sshll.u32 [#allocation5], 4
      %s45 = int_to_ptr.vmem [resolvable:$true] %s44
      %50 = dma.hbm_to_vmem [thread:$0]  %s6, 2048, %s45, [#allocation6], 64, 64, 4
    $region29: #{transformer_block_pallas.1} parent=1 // pred_fallthru
      _
    // Predicated region
    $region30: #{transformer_block_pallas.1} parent=1 // pred_check
      _
    $region31: #{transformer_block_pallas.1} parent=1 // pred_check_branch
      %52 = sbr.rel (0) target = $region33
    $region32: #{transformer_block_pallas.1} parent=1 // pred_region
      _
    $region33: #{transformer_block_pallas.1} parent=1 // pred_fallthru
      _
    // Predicated region
    $region34: #{transformer_block_pallas.1} parent=1 // pred_check
      _
    $region35: #{transformer_block_pallas.1} parent=1 // pred_check_branch
      %54 = sbr.rel (0) target = $region37
    $region36: #{transformer_block_pallas.1} parent=1 // pred_region
      %s56 = ssub.s32 128, 128
      %57 = vsyncadd [#allocation6], %s56
      %s59 = sshll.u32 [#allocation7], 4
      %s60 = int_to_ptr.vmem [resolvable:$true] %s59
      %62 = dma.hbm_to_vmem [thread:$0]  %s8, 128, %s60, [#allocation6]
    $region37: #{transformer_block_pallas.1} parent=1 // pred_fallthru
      _
    // Predicated region
    $region38: #{transformer_block_pallas.1} parent=1 // pred_check
      _
    $region39: #{transformer_block_pallas.1} parent=1 // pred_check_branch
      %64 = sbr.rel (0) target = $region41
    $region40: #{transformer_block_pallas.1} parent=1 // pred_region
      %65 = dma.done [#allocation3], 2048
    $region41: #{transformer_block_pallas.1} parent=1 // pred_fallthru
      _
    // Predicated region
    $region42: #{transformer_block_pallas.1} parent=1 // pred_check
      _
    $region43: #{transformer_block_pallas.1} parent=1 // pred_check_branch
      %67 = sbr.rel (0) target = $region45
    $region44: #{transformer_block_pallas.1} parent=1 // pred_region
      %68 = dma.done [#allocation6], 2048
    $region45: #{transformer_block_pallas.1} parent=1 // pred_fallthru
      _
    // Predicated region
    $region46: #{transformer_block_pallas.1} parent=1 // pred_check
      _
    $region47: #{transformer_block_pallas.1} parent=1 // pred_check_branch
      %70 = sbr.rel (0) target = $region49
    $region48: #{transformer_block_pallas.1} parent=1 // pred_region
      %71 = dma.done [#allocation6], 128
    $region49: #{transformer_block_pallas.1} parent=1 // pred_fallthru
      _
    %v73 = vld [vmem:[#allocation7] sm:$0x3f]
    %v74 = vld [vmem:[%s0] sm:$0xff]
    %v75 = vld [vmem:[%s0 + $0x8] sm:$0xff]
    %v76 = vld [vmem:[%s0 + $0x10] sm:$0xff]
    %v77 = vld [vmem:[%s0 + $0x18] sm:$0xff]
    %v78 = vld [vmem:[%s3] sm:$0xff]
    %v79 = vld [vmem:[%s3 + $0x8] sm:$0xff]
    %vm80 = vcmask 130048
    %v82 = vsel %vm80, %v74, 0
    %v85 = vsel %vm80, %v75, 0
    %v88 = vsel %vm80, %v76, 0
    %v91 = vsel %vm80, %v77, 0
    %93 = vmatprep.subr.mxu0 0.0
    %94 = vmatpush1.msra.mxu0 %v78
    %95 = vmatprep.subr.mxu0 0.0
    %96 = vmatpush1.msra.mxu0 %v79
    %97 = vmatprep.subr.mxu0 0.0
    %98 = vmatpush1.msra.mxu0 0.0
    %99 = vmatprep.subr.mxu0 0.0
    %100 = vmatpush1.msra.mxu0 0.0
    %101 = vmatprep.subr.mxu0 0.0
    %102 = vmatpush1.msra.mxu0 0.0
    %103 = vmatprep.subr.mxu0 0.0
    %104 = vmatpush1.msra.mxu0 0.0
    %105 = vmatprep.subr.mxu0 0.0
    %106 = vmatpush1.msra.mxu0 0.0
    %107 = vmatprep.subr.mxu0 0.0
    %108 = vmatpush1.msra.mxu0 0.0
    %109 = vmatprep.subr.mxu0 0.0
    %110 = vmatpush1.msra.mxu0 0.0
    %111 = vmatprep.subr.mxu0 0.0
    %112 = vmatpush1.msra.mxu0 0.0
    %113 = vmatprep.subr.mxu0 0.0
    %114 = vmatpush1.msra.mxu0 0.0
    %115 = vmatprep.subr.mxu0 0.0
    %116 = vmatpush1.msra.mxu0 0.0
    %117 = vmatprep.subr.mxu0 0.0
    %118 = vmatpush1.msra.mxu0 0.0
    %119 = vmatprep.subr.mxu0 0.0
    %120 = vmatpush1.msra.mxu0 0.0
    %121 = vmatprep.subr.mxu0 0.0
    %122 = vmatpush1.msra.mxu0 0.0
    %123 = vmatprep.subr.mxu0 0.0
    %124 = vmatpush1.msra.mxu0 0.0
    %125 = vmatprep.subr.mxu0 0.0
    %126 = vmatpush1.msra.mxu0 0.0
    %127 = vmatprep.subr.mxu0 0.0
    %128 = vmatpush1.msra.mxu0 0.0
    %129 = vmatprep.subr.mxu0 0.0
    %130 = vmatpush1.msra.mxu0 0.0
    %131 = vmatprep.subr.mxu0 0.0
    %132 = vmatpush1.msra.mxu0 0.0
    %133 = vmatprep.subr.mxu0 0.0
    %134 = vmatpush1.msra.mxu0 0.0
    %135 = vmatprep.subr.mxu0 0.0
    %136 = vmatpush1.msra.mxu0 0.0
    %137 = vmatprep.subr.mxu0 0.0
    %138 = vmatpush1.msra.mxu0 0.0
    %139 = vmatprep.subr.mxu0 0.0
    %140 = vmatpush1.msra.mxu0 0.0
    %141 = vmatprep.subr.mxu0 0.0
    %142 = vmatpush1.msra.mxu0 0.0
    %143 = vmatprep.subr.mxu0 0.0
    %144 = vmatpush1.msra.mxu0 0.0
    %145 = vmatprep.subr.mxu0 0.0
    %146 = vmatpush1.msra.mxu0 0.0
    %147 = vmatprep.subr.mxu0 0.0
    %148 = vmatpush1.msra.mxu0 0.0
    %149 = vmatprep.subr.mxu0 0.0
    %150 = vmatpush1.msra.mxu0 0.0
    %151 = vmatprep.subr.mxu0 0.0
    %152 = vmatpush1.msra.mxu0 0.0
    %153 = vmatprep.subr.mxu0 0.0
    %154 = vmatpush1.msra.mxu0 0.0
    %155 = vmatprep.subr.mxu0 0.0
    %156 = vmatpush1.msra.mxu0 0.0
    %157 = vmatprep.mubr.f32.mxu0 0.0
    %158 = vmatmul.mubr.f32.gmra.mrb[0].mxu0 %v82
    %v159 = vpop.f32.mrb[0].mxu0
    %v160 = vadd.f32 0.0, %v159
    %v161 = vpop.f32.mrb[0].mxu0
    %162 = vmatprep.mubr.f32.mxu0 0.0
    %163 = vmatmul.mubr.f32.gmra.mrb[0].mxu0 %v85
    %v164 = vpop.f32.mrb[0].mxu0
    %v165 = vadd.f32 0.0, %v164
    %v166 = vpop.f32.mrb[0].mxu0
    %167 = vmatprep.mubr.f32.mxu0 0.0
    %168 = vmatmul.mubr.f32.gmra.mrb[0].mxu0 %v88
    %v169 = vpop.f32.mrb[0].mxu0
    %v170 = vadd.f32 0.0, %v169
    %v171 = vpop.f32.mrb[0].mxu0
    %172 = vmatprep.mubr.f32.mxu0 0.0
    %173 = vmatmul.mubr.f32.gmra.mrb[0].mxu0 %v91
    %v174 = vpop.f32.mrb[0].mxu0
    %v175 = vadd.f32 0.0, %v174
    %v176 = vpop.f32.mrb[0].mxu0
    %177 = vdwg.mxu0
    %180 = vrot.lane.b32.xlu0 %v170, 122
    %v181 = vpop.permute.xlu0 %180
    %182 = vrot.lane.b32.xlu0 %v175, 122
    %v183 = vpop.permute.xlu0 %182
    %vm184 = vcmask 48128
    %v185 = vsel %vm184, %v181, 0
    %v187 = vsel %vm184, %v183, 0
    %v190 = vsel %vm184, %v160, 0
    %v193 = vsel %vm184, %v165, 0
    %195 = vmatprep.subr.mxu0 0.0
    %196 = vmatpush1.xpose.msra.mxu0 %v190
    %197 = vmatprep.subr.mxu0 0.0
    %198 = vmatpush1.xpose.msra.mxu0 %v193
    %199 = vmatprep.subr.mxu0 0.0
    %200 = vmatpush1.xpose.msra.mxu0 0.0
    %201 = vmatprep.subr.mxu0 0.0
    %202 = vmatpush1.xpose.msra.mxu0 0.0
    %203 = vmatprep.subr.mxu0 0.0
    %204 = vmatpush1.xpose.msra.mxu0 0.0
    %205 = vmatprep.subr.mxu0 0.0
    %206 = vmatpush1.xpose.msra.mxu0 0.0
    %207 = vmatprep.subr.mxu0 0.0
    %208 = vmatpush1.xpose.msra.mxu0 0.0
    %209 = vmatprep.subr.mxu0 0.0
    %210 = vmatpush1.xpose.msra.mxu0 0.0
    %211 = vmatprep.subr.mxu0 0.0
    %212 = vmatpush1.xpose.msra.mxu0 0.0
    %213 = vmatprep.subr.mxu0 0.0
    %214 = vmatpush1.xpose.msra.mxu0 0.0
    %215 = vmatprep.subr.mxu0 0.0
    %216 = vmatpush1.xpose.msra.mxu0 0.0
    %217 = vmatprep.subr.mxu0 0.0
    %218 = vmatpush1.xpose.msra.mxu0 0.0
    %219 = vmatprep.subr.mxu0 0.0
    %220 = vmatpush1.xpose.msra.mxu0 0.0
    %221 = vmatprep.subr.mxu0 0.0
    %222 = vmatpush1.xpose.msra.mxu0 0.0
    %223 = vmatprep.subr.mxu0 0.0
    %224 = vmatpush1.xpose.msra.mxu0 0.0
    %225 = vmatprep.subr.mxu0 0.0
    %226 = vmatpush1.xpose.msra.mxu0 0.0
    %227 = vmatprep.subr.mxu0 0.0
    %228 = vmatpush1.xpose.msra.mxu0 0.0
    %229 = vmatprep.subr.mxu0 0.0
    %230 = vmatpush1.xpose.msra.mxu0 0.0
    %231 = vmatprep.subr.mxu0 0.0
    %232 = vmatpush1.xpose.msra.mxu0 0.0
    %233 = vmatprep.subr.mxu0 0.0
    %234 = vmatpush1.xpose.msra.mxu0 0.0
    %235 = vmatprep.subr.mxu0 0.0
    %236 = vmatpush1.xpose.msra.mxu0 0.0
    %237 = vmatprep.subr.mxu0 0.0
    %238 = vmatpush1.xpose.msra.mxu0 0.0
    %239 = vmatprep.subr.mxu0 0.0
    %240 = vmatpush1.xpose.msra.mxu0 0.0
    %241 = vmatprep.subr.mxu0 0.0
    %242 = vmatpush1.xpose.msra.mxu0 0.0
    %243 = vmatprep.subr.mxu0 0.0
    %244 = vmatpush1.xpose.msra.mxu0 0.0
    %245 = vmatprep.subr.mxu0 0.0
    %246 = vmatpush1.xpose.msra.mxu0 0.0
    %247 = vmatprep.subr.mxu0 0.0
    %248 = vmatpush1.xpose.msra.mxu0 0.0
    %249 = vmatprep.subr.mxu0 0.0
    %250 = vmatpush1.xpose.msra.mxu0 0.0
    %251 = vmatprep.subr.mxu0 0.0
    %252 = vmatpush1.xpose.msra.mxu0 0.0
    %253 = vmatprep.subr.mxu0 0.0
    %254 = vmatpush1.xpose.msra.mxu0 0.0
    %255 = vmatprep.subr.mxu0 0.0
    %256 = vmatpush1.xpose.msra.mxu0 0.0
    %257 = vmatprep.subr.mxu0 0.0
    %258 = vmatpush1.xpose.msra.mxu0 0.0
    %259 = vmatprep.mubr.f32.mxu0 0.0
    %260 = vmatmul.mubr.f32.gmra.mrb[0].mxu0 %v185
    %v261 = vpop.f32.mrb[0].mxu0
    %v262 = vadd.f32 0.0, %v261
    %v263 = vpop.f32.mrb[0].mxu0
    %264 = vmatprep.mubr.f32.mxu0 0.0
    %265 = vmatmul.mubr.f32.gmra.mrb[0].mxu0 %v187
    %v266 = vpop.f32.mrb[0].mxu0
    %v267 = vadd.f32 0.0, %v266
    %v268 = vpop.f32.mrb[0].mxu0
    %269 = vdwg.mxu0
    %v270 = vmul.f32 %v262, 0.088388346
    %v271 = vmul.f32 %v267, 0.088388346
    %v272 = vlaneseq
    %v273 = vshrl.u32 %v272, 7
    %v274 = vadd.s32 %v273, 8
    %v275 = vshra.s32 %v273, 3
    %v276 = vshra.s32 %v274, 3
    %v277 = vlaneseq
    %v278 = vand.u32 %v277, 127
    %v279 = vshra.s32 %v278, 3
    %vm280 = vcmp.eq.s32.totalorder %v275, %v279
    %vm281 = vcmp.eq.s32.totalorder %v276, %v279
    %v282 = vsel %vm280, %v270, -1e+30
    %v283 = vsel %vm281, %v271, -1e+30
    %v284 = vsel %vm80, %v282, -inf
    %285 = vmax.xlane.f32.xlu0 %v284
    %v286 = vpop.xlane.xlu0 %285
    %v287 = vsel %vm80, %v283, -inf
    %288 = vmax.xlane.f32.xlu0 %v287
    %v289 = vpop.xlane.xlu0 %288
    %v290 = vsub.f32 %v282, %v286
    %v291 = vsub.f32 %v283, %v289
    %v292 = vmul.f32 %v290, 1.442695
    %v293 = vpow.pop %v292
    %v294 = vmul.f32 %v291, 1.442695
    %v295 = vpow.pop %v294
    %v296 = vsel %vm80, %v293, 0.0
    %297 = vadd.xlane.f32.xlu0 %v296
    %v298 = vpop.xlane.xlu0 %297
    %v299 = vsel %vm80, %v295, 0.0
    %300 = vadd.xlane.f32.xlu0 %v299
    %v301 = vpop.xlane.xlu0 %300
    %v302 = vrcp.pop %v298
    %v303 = vmul.f32 %v293, %v302
    %v304 = vrcp.pop %v301
    %v305 = vmul.f32 %v295, %v304
    %v306 = vld [vmem:[%s1] sm:$0xff]
    %v307 = vld [vmem:[%s1 + $0x8] sm:$0xff]
    %v309 = vsel %vm80, %v303, 0
    %v312 = vsel %vm80, %v305, 0
    %314 = vmatprep.subr.mxu0 0.0
    %315 = vmatpush1.msra.mxu0 %v306
    %316 = vmatprep.subr.mxu0 0.0
    %317 = vmatpush1.msra.mxu0 %v307
    %318 = vmatprep.subr.mxu0 0.0
    %319 = vmatpush1.msra.mxu0 0.0
    %320 = vmatprep.subr.mxu0 0.0
    %321 = vmatpush1.msra.mxu0 0.0
    %322 = vmatprep.subr.mxu0 0.0
    %323 = vmatpush1.msra.mxu0 0.0
    %324 = vmatprep.subr.mxu0 0.0
    %325 = vmatpush1.msra.mxu0 0.0
    %326 = vmatprep.subr.mxu0 0.0
    %327 = vmatpush1.msra.mxu0 0.0
    %328 = vmatprep.subr.mxu0 0.0
    %329 = vmatpush1.msra.mxu0 0.0
    %330 = vmatprep.subr.mxu0 0.0
    %331 = vmatpush1.msra.mxu0 0.0
    %332 = vmatprep.subr.mxu0 0.0
    %333 = vmatpush1.msra.mxu0 0.0
    %334 = vmatprep.subr.mxu0 0.0
    %335 = vmatpush1.msra.mxu0 0.0
    %336 = vmatprep.subr.mxu0 0.0
    %337 = vmatpush1.msra.mxu0 0.0
    %338 = vmatprep.subr.mxu0 0.0
    %339 = vmatpush1.msra.mxu0 0.0
    %340 = vmatprep.subr.mxu0 0.0
    %341 = vmatpush1.msra.mxu0 0.0
    %342 = vmatprep.subr.mxu0 0.0
    %343 = vmatpush1.msra.mxu0 0.0
    %344 = vmatprep.subr.mxu0 0.0
    %345 = vmatpush1.msra.mxu0 0.0
    %346 = vmatprep.subr.mxu0 0.0
    %347 = vmatpush1.msra.mxu0 0.0
    %348 = vmatprep.subr.mxu0 0.0
    %349 = vmatpush1.msra.mxu0 0.0
    %350 = vmatprep.subr.mxu0 0.0
    %351 = vmatpush1.msra.mxu0 0.0
    %352 = vmatprep.subr.mxu0 0.0
    %353 = vmatpush1.msra.mxu0 0.0
    %354 = vmatprep.subr.mxu0 0.0
    %355 = vmatpush1.msra.mxu0 0.0
    %356 = vmatprep.subr.mxu0 0.0
    %357 = vmatpush1.msra.mxu0 0.0
    %358 = vmatprep.subr.mxu0 0.0
    %359 = vmatpush1.msra.mxu0 0.0
    %360 = vmatprep.subr.mxu0 0.0
    %361 = vmatpush1.msra.mxu0 0.0
    %362 = vmatprep.subr.mxu0 0.0
    %363 = vmatpush1.msra.mxu0 0.0
    %364 = vmatprep.subr.mxu0 0.0
    %365 = vmatpush1.msra.mxu0 0.0
    %366 = vmatprep.subr.mxu0 0.0
    %367 = vmatpush1.msra.mxu0 0.0
    %368 = vmatprep.subr.mxu0 0.0
    %369 = vmatpush1.msra.mxu0 0.0
    %370 = vmatprep.subr.mxu0 0.0
    %371 = vmatpush1.msra.mxu0 0.0
    %372 = vmatprep.subr.mxu0 0.0
    %373 = vmatpush1.msra.mxu0 0.0
    %374 = vmatprep.subr.mxu0 0.0
    %375 = vmatpush1.msra.mxu0 0.0
    %376 = vmatprep.subr.mxu0 0.0
    %377 = vmatpush1.msra.mxu0 0.0
    %378 = vmatprep.mubr.f32.mxu0 0.0
    %379 = vmatmul.mubr.f32.gmra.mrb[0].mxu0 %v309
    %v380 = vpop.f32.mrb[0].mxu0
    %v381 = vadd.f32 0.0, %v380
    %v382 = vpop.f32.mrb[0].mxu0
    %383 = vmatprep.mubr.f32.mxu0 0.0
    %384 = vmatmul.mubr.f32.gmra.mrb[0].mxu0 %v312
    %v385 = vpop.f32.mrb[0].mxu0
    %v386 = vadd.f32 0.0, %v385
    %v387 = vpop.f32.mrb[0].mxu0
    %388 = vdwg.mxu0
    %v389 = vand.u32 %v278, 15
    %vm390 = vcmp.eq.s32.totalorder %v389, %v273
    %vm391 = vcmp.eq.s32.totalorder %v389, %v274
    %v392 = vsel %vm390, 1, 0
    %v393 = vsel %vm391, 1, 0
    %v394 = vcvt.s32.f32 %v392
    %v395 = vcvt.s32.f32 %v393
    %v397 = vsel %vm80, %v381, 0
    %v400 = vsel %vm80, %v386, 0
    %402 = vmatprep.subr.mxu0 0.0
    %403 = vmatpush1.msra.mxu0 %v394
    %404 = vmatprep.subr.mxu0 0.0
    %405 = vmatpush1.msra.mxu0 %v395
    %406 = vmatprep.subr.mxu0 0.0
    %407 = vmatpush1.msra.mxu0 0.0
    %408 = vmatprep.subr.mxu0 0.0
    %409 = vmatpush1.msra.mxu0 0.0
    %410 = vmatprep.subr.mxu0 0.0
    %411 = vmatpush1.msra.mxu0 0.0
    %412 = vmatprep.subr.mxu0 0.0
    %413 = vmatpush1.msra.mxu0 0.0
    %414 = vmatprep.subr.mxu0 0.0
    %415 = vmatpush1.msra.mxu0 0.0
    %416 = vmatprep.subr.mxu0 0.0
    %417 = vmatpush1.msra.mxu0 0.0
    %418 = vmatprep.subr.mxu0 0.0
    %419 = vmatpush1.msra.mxu0 0.0
    %420 = vmatprep.subr.mxu0 0.0
    %421 = vmatpush1.msra.mxu0 0.0
    %422 = vmatprep.subr.mxu0 0.0
    %423 = vmatpush1.msra.mxu0 0.0
    %424 = vmatprep.subr.mxu0 0.0
    %425 = vmatpush1.msra.mxu0 0.0
    %426 = vmatprep.subr.mxu0 0.0
    %427 = vmatpush1.msra.mxu0 0.0
    %428 = vmatprep.subr.mxu0 0.0
    %429 = vmatpush1.msra.mxu0 0.0
    %430 = vmatprep.subr.mxu0 0.0
    %431 = vmatpush1.msra.mxu0 0.0
    %432 = vmatprep.subr.mxu0 0.0
    %433 = vmatpush1.msra.mxu0 0.0
    %434 = vmatprep.subr.mxu0 0.0
    %435 = vmatpush1.msra.mxu0 0.0
    %436 = vmatprep.subr.mxu0 0.0
    %437 = vmatpush1.msra.mxu0 0.0
    %438 = vmatprep.subr.mxu0 0.0
    %439 = vmatpush1.msra.mxu0 0.0
    %440 = vmatprep.subr.mxu0 0.0
    %441 = vmatpush1.msra.mxu0 0.0
    %442 = vmatprep.subr.mxu0 0.0
    %443 = vmatpush1.msra.mxu0 0.0
    %444 = vmatprep.subr.mxu0 0.0
    %445 = vmatpush1.msra.mxu0 0.0
    %446 = vmatprep.subr.mxu0 0.0
    %447 = vmatpush1.msra.mxu0 0.0
    %448 = vmatprep.subr.mxu0 0.0
    %449 = vmatpush1.msra.mxu0 0.0
    %450 = vmatprep.subr.mxu0 0.0
    %451 = vmatpush1.msra.mxu0 0.0
    %452 = vmatprep.subr.mxu0 0.0
    %453 = vmatpush1.msra.mxu0 0.0
    %454 = vmatprep.subr.mxu0 0.0
    %455 = vmatpush1.msra.mxu0 0.0
    %456 = vmatprep.subr.mxu0 0.0
    %457 = vmatpush1.msra.mxu0 0.0
    %458 = vmatprep.subr.mxu0 0.0
    %459 = vmatpush1.msra.mxu0 0.0
    %460 = vmatprep.subr.mxu0 0.0
    %461 = vmatpush1.msra.mxu0 0.0
    %462 = vmatprep.subr.mxu0 0.0
    %463 = vmatpush1.msra.mxu0 0.0
    %464 = vmatprep.subr.mxu0 0.0
    %465 = vmatpush1.msra.mxu0 0.0
    %466 = vmatprep.mubr.f32.mxu0 0.0
    %467 = vmatmul.mubr.f32.gmra.mrb[0].mxu0 %v397
    %v468 = vpop.f32.mrb[0].mxu0
    %v469 = vadd.f32 0.0, %v468
    %v470 = vpop.f32.mrb[0].mxu0
    %471 = vmatprep.mubr.f32.mxu0 0.0
    %472 = vmatmul.mubr.f32.gmra.mrb[0].mxu0 %v400
    %v473 = vpop.f32.mrb[0].mxu0
    %v474 = vadd.f32 0.0, %v473
    %v475 = vpop.f32.mrb[0].mxu0
    %476 = vdwg.mxu0
    %v477 = vshra.s32 %v278, 4
    %v478 = vand.u32 %v273, 7
    %v479 = vand.u32 %v274, 7
    %vm480 = vcmp.eq.s32.totalorder %v477, %v478
    %vm481 = vcmp.eq.s32.totalorder %v477, %v479
    %v482 = vsel %vm480, 1, 0
    %v483 = vsel %vm481, 1, 0
    %v484 = vcvt.s32.f32 %v482
    %v485 = vcvt.s32.f32 %v483
    %vm486 = vcmp.eq.s32.totalorder %v273, %v279
    %v487 = vsel %vm486, 1, 0
    %v488 = vcvt.s32.f32 %v487
    %v489 = vmul.f32 %v469, %v484
    %v490 = vmul.f32 %v474, %v485
    %v492 = vsel %vm80, %v488, 0
    %494 = vmatprep.subr.mxu0 0.0
    %495 = vmatpush1.msra.mxu0 %v489
    %496 = vmatprep.subr.mxu0 0.0
    %497 = vmatpush1.msra.mxu0 %v490
    %498 = vmatprep.subr.mxu0 0.0
    %499 = vmatpush1.msra.mxu0 0.0
    %500 = vmatprep.subr.mxu0 0.0
    %501 = vmatpush1.msra.mxu0 0.0
    %502 = vmatprep.subr.mxu0 0.0
    %503 = vmatpush1.msra.mxu0 0.0
    %504 = vmatprep.subr.mxu0 0.0
    %505 = vmatpush1.msra.mxu0 0.0
    %506 = vmatprep.subr.mxu0 0.0
    %507 = vmatpush1.msra.mxu0 0.0
    %508 = vmatprep.subr.mxu0 0.0
    %509 = vmatpush1.msra.mxu0 0.0
    %510 = vmatprep.subr.mxu0 0.0
    %511 = vmatpush1.msra.mxu0 0.0
    %512 = vmatprep.subr.mxu0 0.0
    %513 = vmatpush1.msra.mxu0 0.0
    %514 = vmatprep.subr.mxu0 0.0
    %515 = vmatpush1.msra.mxu0 0.0
    %516 = vmatprep.subr.mxu0 0.0
    %517 = vmatpush1.msra.mxu0 0.0
    %518 = vmatprep.subr.mxu0 0.0
    %519 = vmatpush1.msra.mxu0 0.0
    %520 = vmatprep.subr.mxu0 0.0
    %521 = vmatpush1.msra.mxu0 0.0
    %522 = vmatprep.subr.mxu0 0.0
    %523 = vmatpush1.msra.mxu0 0.0
    %524 = vmatprep.subr.mxu0 0.0
    %525 = vmatpush1.msra.mxu0 0.0
    %526 = vmatprep.subr.mxu0 0.0
    %527 = vmatpush1.msra.mxu0 0.0
    %528 = vmatprep.subr.mxu0 0.0
    %529 = vmatpush1.msra.mxu0 0.0
    %530 = vmatprep.subr.mxu0 0.0
    %531 = vmatpush1.msra.mxu0 0.0
    %532 = vmatprep.subr.mxu0 0.0
    %533 = vmatpush1.msra.mxu0 0.0
    %534 = vmatprep.subr.mxu0 0.0
    %535 = vmatpush1.msra.mxu0 0.0
    %536 = vmatprep.subr.mxu0 0.0
    %537 = vmatpush1.msra.mxu0 0.0
    %538 = vmatprep.subr.mxu0 0.0
    %539 = vmatpush1.msra.mxu0 0.0
    %540 = vmatprep.subr.mxu0 0.0
    %541 = vmatpush1.msra.mxu0 0.0
    %542 = vmatprep.subr.mxu0 0.0
    %543 = vmatpush1.msra.mxu0 0.0
    %544 = vmatprep.subr.mxu0 0.0
    %545 = vmatpush1.msra.mxu0 0.0
    %546 = vmatprep.subr.mxu0 0.0
    %547 = vmatpush1.msra.mxu0 0.0
    %548 = vmatprep.subr.mxu0 0.0
    %549 = vmatpush1.msra.mxu0 0.0
    %550 = vmatprep.subr.mxu0 0.0
    %551 = vmatpush1.msra.mxu0 0.0
    %552 = vmatprep.subr.mxu0 0.0
    %553 = vmatpush1.msra.mxu0 0.0
    %554 = vmatprep.subr.mxu0 0.0
    %555 = vmatpush1.msra.mxu0 0.0
    %556 = vmatprep.subr.mxu0 0.0
    %557 = vmatpush1.msra.mxu0 0.0
    %558 = vmatprep.mubr.f32.mxu0 0.0
    %559 = vmatmul.mubr.f32.gmra.mrb[0].mxu0 %v492
    %v560 = vpop.f32.mrb[0].mxu0
    %v561 = vadd.f32 0.0, %v560
    %v562 = vpop.f32.mrb[0].mxu0
    %563 = vdwg.mxu0
    %v564 = vpack.c.bf16 %v561, %v561
    %v565 = vld [vmem:[%s4] sm:$0xf]
    %v566 = vld [vmem:[%s4 + $0x4] sm:$0xf]
    %v567 = vld [vmem:[%s4 + $0x8] sm:$0xf]
    %v568 = vld [vmem:[%s4 + $0xc] sm:$0xf]
    %v569 = vld [vmem:[%s4 + $0x10] sm:$0xf]
    %v570 = vld [vmem:[%s4 + $0x14] sm:$0xf]
    %v571 = vld [vmem:[%s4 + $0x18] sm:$0xf]
    %v572 = vld [vmem:[%s4 + $0x1c] sm:$0xf]
    %v573 = vld [vmem:[%s4 + $0x20] sm:$0xf]
    %v574 = vld [vmem:[%s4 + $0x24] sm:$0xf]
    %v575 = vld [vmem:[%s4 + $0x28] sm:$0xf]
    %v576 = vld [vmem:[%s4 + $0x2c] sm:$0xf]
    %v577 = vld [vmem:[%s4 + $0x30] sm:$0xf]
    %v578 = vld [vmem:[%s4 + $0x34] sm:$0xf]
    %v579 = vld [vmem:[%s4 + $0x38] sm:$0xf]
    %v580 = vld [vmem:[%s4 + $0x3c] sm:$0xf]
    %v581 = vlaneseq
    %v582 = vshrl.u32 %v581, 7
    %v583 = vsub.s32 0, %v582
    %v584 = vrot.slane %v73, %v583
    %v601 = vunpack.c.l.b16 %v565
    %v602 = vunpack.c.l.b16 %v566
    %v603 = vunpack.c.l.b16 %v567
    %v604 = vunpack.c.l.b16 %v568
    %v605 = vunpack.c.l.b16 %v569
    %v606 = vunpack.c.l.b16 %v570
    %v607 = vunpack.c.l.b16 %v571
    %v608 = vunpack.c.l.b16 %v572
    %v609 = vunpack.c.l.b16 %v573
    %v610 = vunpack.c.l.b16 %v574
    %v611 = vunpack.c.l.b16 %v575
    %v612 = vunpack.c.l.b16 %v576
    %v613 = vunpack.c.l.b16 %v577
    %v614 = vunpack.c.l.b16 %v578
    %v615 = vunpack.c.l.b16 %v579
    %v616 = vunpack.c.l.b16 %v580
    %v617 = vpack.c.b16 %v602, %v601
    %v618 = vpack.c.b16 %v604, %v603
    %v619 = vpack.c.b16 %v606, %v605
    %v620 = vpack.c.b16 %v608, %v607
    %v621 = vpack.c.b16 %v610, %v609
    %v622 = vpack.c.b16 %v612, %v611
    %v623 = vpack.c.b16 %v614, %v613
    %v624 = vpack.c.b16 %v616, %v615
    %633 = vmatprep.subr.bf16.mxu0 0
    %634 = vmatpush1.bf16.msra.mxu0 %v617
    %635 = vmatprep.subr.bf16.mxu0 0
    %636 = vmatpush1.bf16.msra.mxu0 %v618
    %637 = vmatprep.subr.bf16.mxu0 0
    %638 = vmatpush1.bf16.msra.mxu0 %v619
    %639 = vmatprep.subr.bf16.mxu0 0
    %640 = vmatpush1.bf16.msra.mxu0 %v620
    %641 = vmatprep.subr.bf16.mxu0 0
    %642 = vmatpush1.bf16.msra.mxu0 %v621
    %643 = vmatprep.subr.bf16.mxu0 0
    %644 = vmatpush1.bf16.msra.mxu0 %v622
    %645 = vmatprep.subr.bf16.mxu0 0
    %646 = vmatpush1.bf16.msra.mxu0 %v623
    %647 = vmatprep.subr.bf16.mxu0 0
    %648 = vmatpush1.bf16.msra.mxu0 %v624
    %649 = vmatprep.subr.bf16.mxu0 0
    %650 = vmatpush1.bf16.msra.mxu0 0
    %651 = vmatprep.subr.bf16.mxu0 0
    %652 = vmatpush1.bf16.msra.mxu0 0
    %653 = vmatprep.subr.bf16.mxu0 0
    %654 = vmatpush1.bf16.msra.mxu0 0
    %655 = vmatprep.subr.bf16.mxu0 0
    %656 = vmatpush1.bf16.msra.mxu0 0
    %657 = vmatprep.subr.bf16.mxu0 0
    %658 = vmatpush1.bf16.msra.mxu0 0
    %659 = vmatprep.subr.bf16.mxu0 0
    %660 = vmatpush1.bf16.msra.mxu0 0
    %661 = vmatprep.subr.bf16.mxu0 0
    %662 = vmatpush1.bf16.msra.mxu0 0
    %663 = vmatprep.subr.bf16.mxu0 0
    %664 = vmatpush1.bf16.msra.mxu0 0
    %665 = vmatprep.mubr.bf16.mxu0 0
    %666 = vmatmul.mubr.bf16.gmra.mrb[0].mxu0 %v564
    %v667 = vpop.f32.mrb[0].mxu0
    %v668 = vadd.f32 %v584, %v667
    %v669 = vpop.f32.mrb[0].mxu0
    %v670 = vpop.f32.mrb[0].mxu0
    %v671 = vpop.f32.mrb[0].mxu0
    %672 = vdwg.mxu0
    %v673 = vld [vmem:[%s2] sm:$0x3]
    %v674 = vadd.f32 %v668, %v673
    %vm675 = vcmask 1041408
    %v676 = vsel %vm675, %v674, 0.0
    %677 = vadd.xlane.f32.xlu0 %v676
    %v678 = vpop.xlane.xlu0 %677
    %v679 = vrcp.pop 128.0
    %v680 = vmul.f32 %v678, %v679
    %v681 = vsub.f32 %v674, %v680
    %v682 = vmul.f32 %v681, %v681
    %v683 = vsel %vm675, %v682, 0.0
    %684 = vadd.xlane.f32.xlu0 %v683
    %v685 = vpop.xlane.xlu0 %684
    %v686 = vmul.f32 %v685, %v679
    %v687 = vadd.f32 %v686, 1e-05
    %v688 = vrsqrt.pop %v687
    %v689 = vmul.f32 %v681, %v688
    %v690 = vlaneseq
    %v691 = vshrl.u32 %v690, 7
    %v692 = vsub.s32 1, %v691
    %v693 = vrot.slane %v73, %v692
    %v694 = vmul.f32 %v689, %v693
    %v695 = vlaneseq
    %v696 = vshrl.u32 %v695, 7
    %v697 = vsub.s32 2, %v696
    %v698 = vrot.slane %v73, %v697
    %v699 = vadd.f32 %v694, %v698
    %v700 = vpack.c.bf16 %v699, %v699
    %v701 = vld [vmem:[#allocation2] sm:$0xff]
    %v702 = vld [vmem:[#allocation2 + $0x8] sm:$0xff]
    %v703 = vld [vmem:[#allocation2 + $0x10] sm:$0xff]
    %v704 = vld [vmem:[#allocation2 + $0x18] sm:$0xff]
    %v705 = vld [vmem:[#allocation2 + $0x20] sm:$0xff]
    %v706 = vld [vmem:[#allocation2 + $0x28] sm:$0xff]
    %v707 = vld [vmem:[#allocation2 + $0x30] sm:$0xff]
    %v708 = vld [vmem:[#allocation2 + $0x38] sm:$0xff]
    %v709 = vld [vmem:[#allocation2 + $0x40] sm:$0xff]
    %v710 = vld [vmem:[#allocation2 + $0x48] sm:$0xff]
    %v711 = vld [vmem:[#allocation2 + $0x50] sm:$0xff]
    %v712 = vld [vmem:[#allocation2 + $0x58] sm:$0xff]
    %v713 = vld [vmem:[#allocation2 + $0x60] sm:$0xff]
    %v714 = vld [vmem:[#allocation2 + $0x68] sm:$0xff]
    %v715 = vld [vmem:[#allocation2 + $0x70] sm:$0xff]
    %v716 = vld [vmem:[#allocation2 + $0x78] sm:$0xff]
    %v717 = vld [vmem:[%s7] sm:$0x3]
    %v719 = vlaneseq
    %v720 = vshrl.u32 %v719, 7
    %v721 = vsub.s32 0, %v720
    %v722 = vrot.slane %v717, %v721
    %v723 = vlaneseq
    %v724 = vshrl.u32 %v723, 7
    %v725 = vsub.s32 1, %v724
    %v726 = vrot.slane %v717, %v725
    %v745 = vunpack.c.l.b16 %v701
    %v746 = vunpack.c.h.b16 %v701
    %v747 = vunpack.c.l.b16 %v702
    %v748 = vunpack.c.h.b16 %v702
    %v749 = vunpack.c.l.b16 %v703
    %v750 = vunpack.c.h.b16 %v703
    %v751 = vunpack.c.l.b16 %v704
    %v752 = vunpack.c.h.b16 %v704
    %v753 = vunpack.c.l.b16 %v705
    %v754 = vunpack.c.h.b16 %v705
    %v755 = vunpack.c.l.b16 %v706
    %v756 = vunpack.c.h.b16 %v706
    %v757 = vunpack.c.l.b16 %v707
    %v758 = vunpack.c.h.b16 %v707
    %v759 = vunpack.c.l.b16 %v708
    %v760 = vunpack.c.h.b16 %v708
    %v761 = vunpack.c.l.b16 %v709
    %v762 = vunpack.c.h.b16 %v709
    %v763 = vunpack.c.l.b16 %v710
    %v764 = vunpack.c.h.b16 %v710
    %v765 = vunpack.c.l.b16 %v711
    %v766 = vunpack.c.h.b16 %v711
    %v767 = vunpack.c.l.b16 %v712
    %v768 = vunpack.c.h.b16 %v712
    %v769 = vunpack.c.l.b16 %v713
    %v770 = vunpack.c.h.b16 %v713
    %v771 = vunpack.c.l.b16 %v714
    %v772 = vunpack.c.h.b16 %v714
    %v773 = vunpack.c.l.b16 %v715
    %v774 = vunpack.c.h.b16 %v715
    %v775 = vunpack.c.l.b16 %v716
    %v776 = vunpack.c.h.b16 %v716
    %v777 = vpack.c.b16 %v747, %v745
    %v778 = vpack.c.b16 %v748, %v746
    %v779 = vpack.c.b16 %v751, %v749
    %v780 = vpack.c.b16 %v752, %v750
    %v781 = vpack.c.b16 %v755, %v753
    %v782 = vpack.c.b16 %v756, %v754
    %v783 = vpack.c.b16 %v759, %v757
    %v784 = vpack.c.b16 %v760, %v758
    %v785 = vpack.c.b16 %v763, %v761
    %v786 = vpack.c.b16 %v764, %v762
    %v787 = vpack.c.b16 %v767, %v765
    %v788 = vpack.c.b16 %v768, %v766
    %v789 = vpack.c.b16 %v771, %v769
    %v790 = vpack.c.b16 %v772, %v770
    %v791 = vpack.c.b16 %v775, %v773
    %v792 = vpack.c.b16 %v776, %v774
    %809 = vmatprep.subr.bf16.mxu0 %v778
    %810 = vmatpush1.bf16.msra.mxu0 %v777
    %811 = vmatprep.subr.bf16.mxu0 %v780
    %812 = vmatpush1.bf16.msra.mxu0 %v779
    %813 = vmatprep.subr.bf16.mxu0 %v782
    %814 = vmatpush1.bf16.msra.mxu0 %v781
    %815 = vmatprep.subr.bf16.mxu0 %v784
    %816 = vmatpush1.bf16.msra.mxu0 %v783
    %817 = vmatprep.subr.bf16.mxu0 %v786
    %818 = vmatpush1.bf16.msra.mxu0 %v785
    %819 = vmatprep.subr.bf16.mxu0 %v788
    %820 = vmatpush1.bf16.msra.mxu0 %v787
    %821 = vmatprep.subr.bf16.mxu0 %v790
    %822 = vmatpush1.bf16.msra.mxu0 %v789
    %823 = vmatprep.subr.bf16.mxu0 %v792
    %824 = vmatpush1.bf16.msra.mxu0 %v791
    %825 = vmatprep.subr.bf16.mxu0 0
    %826 = vmatpush1.bf16.msra.mxu0 0
    %827 = vmatprep.subr.bf16.mxu0 0
    %828 = vmatpush1.bf16.msra.mxu0 0
    %829 = vmatprep.subr.bf16.mxu0 0
    %830 = vmatpush1.bf16.msra.mxu0 0
    %831 = vmatprep.subr.bf16.mxu0 0
    %832 = vmatpush1.bf16.msra.mxu0 0
    %833 = vmatprep.subr.bf16.mxu0 0
    %834 = vmatpush1.bf16.msra.mxu0 0
    %835 = vmatprep.subr.bf16.mxu0 0
    %836 = vmatpush1.bf16.msra.mxu0 0
    %837 = vmatprep.subr.bf16.mxu0 0
    %838 = vmatpush1.bf16.msra.mxu0 0
    %839 = vmatprep.subr.bf16.mxu0 0
    %840 = vmatpush1.bf16.msra.mxu0 0
    %841 = vmatprep.mubr.bf16.mxu0 0
    %842 = vmatmul.mubr.bf16.gmra.mrb[0].mxu0 %v700
    %v843 = vpop.f32.mrb[0].mxu0
    %v844 = vadd.f32 %v722, %v843
    %v845 = vpop.f32.mrb[0].mxu0
    %v846 = vadd.f32 %v726, %v845
    %v847 = vpop.f32.mrb[0].mxu0
    %v848 = vpop.f32.mrb[0].mxu0
    %849 = vdwg.mxu0
    %v850 = vmax.f32 %v844, 0.0
    %v851 = vmax.f32 %v846, 0.0
    %v852 = vpack.c.bf16 %v850, %v850
    %v853 = vpack.c.bf16 %v851, %v851
    %v854 = vld [vmem:[#allocation5] sm:$0xf]
    %v855 = vld [vmem:[#allocation5 + $0x4] sm:$0xf]
    %v856 = vld [vmem:[#allocation5 + $0x8] sm:$0xf]
    %v857 = vld [vmem:[#allocation5 + $0xc] sm:$0xf]
    %v858 = vld [vmem:[#allocation5 + $0x10] sm:$0xf]
    %v859 = vld [vmem:[#allocation5 + $0x14] sm:$0xf]
    %v860 = vld [vmem:[#allocation5 + $0x18] sm:$0xf]
    %v861 = vld [vmem:[#allocation5 + $0x1c] sm:$0xf]
    %v862 = vld [vmem:[#allocation5 + $0x20] sm:$0xf]
    %v863 = vld [vmem:[#allocation5 + $0x24] sm:$0xf]
    %v864 = vld [vmem:[#allocation5 + $0x28] sm:$0xf]
    %v865 = vld [vmem:[#allocation5 + $0x2c] sm:$0xf]
    %v866 = vld [vmem:[#allocation5 + $0x30] sm:$0xf]
    %v867 = vld [vmem:[#allocation5 + $0x34] sm:$0xf]
    %v868 = vld [vmem:[#allocation5 + $0x38] sm:$0xf]
    %v869 = vld [vmem:[#allocation5 + $0x3c] sm:$0xf]
    %v870 = vld [vmem:[#allocation5 + $0x40] sm:$0xf]
    %v871 = vld [vmem:[#allocation5 + $0x44] sm:$0xf]
    %v872 = vld [vmem:[#allocation5 + $0x48] sm:$0xf]
    %v873 = vld [vmem:[#allocation5 + $0x4c] sm:$0xf]
    %v874 = vld [vmem:[#allocation5 + $0x50] sm:$0xf]
    %v875 = vld [vmem:[#allocation5 + $0x54] sm:$0xf]
    %v876 = vld [vmem:[#allocation5 + $0x58] sm:$0xf]
    %v877 = vld [vmem:[#allocation5 + $0x5c] sm:$0xf]
    %v878 = vld [vmem:[#allocation5 + $0x60] sm:$0xf]
    %v879 = vld [vmem:[#allocation5 + $0x64] sm:$0xf]
    %v880 = vld [vmem:[#allocation5 + $0x68] sm:$0xf]
    %v881 = vld [vmem:[#allocation5 + $0x6c] sm:$0xf]
    %v882 = vld [vmem:[#allocation5 + $0x70] sm:$0xf]
    %v883 = vld [vmem:[#allocation5 + $0x74] sm:$0xf]
    %v884 = vld [vmem:[#allocation5 + $0x78] sm:$0xf]
    %v885 = vld [vmem:[#allocation5 + $0x7c] sm:$0xf]
    %v886 = vlaneseq
    %v887 = vshrl.u32 %v886, 7
    %v888 = vsub.s32 3, %v887
    %v889 = vrot.slane %v73, %v888
    %v922 = vunpack.c.l.b16 %v854
    %v923 = vunpack.c.l.b16 %v855
    %v924 = vunpack.c.l.b16 %v856
    %v925 = vunpack.c.l.b16 %v857
    %v926 = vunpack.c.l.b16 %v858
    %v927 = vunpack.c.l.b16 %v859
    %v928 = vunpack.c.l.b16 %v860
    %v929 = vunpack.c.l.b16 %v861
    %v930 = vunpack.c.l.b16 %v862
    %v931 = vunpack.c.l.b16 %v863
    %v932 = vunpack.c.l.b16 %v864
    %v933 = vunpack.c.l.b16 %v865
    %v934 = vunpack.c.l.b16 %v866
    %v935 = vunpack.c.l.b16 %v867
    %v936 = vunpack.c.l.b16 %v868
    %v937 = vunpack.c.l.b16 %v869
    %v938 = vunpack.c.l.b16 %v870
    %v939 = vunpack.c.l.b16 %v871
    %v940 = vunpack.c.l.b16 %v872
    %v941 = vunpack.c.l.b16 %v873
    %v942 = vunpack.c.l.b16 %v874
    %v943 = vunpack.c.l.b16 %v875
    %v944 = vunpack.c.l.b16 %v876
    %v945 = vunpack.c.l.b16 %v877
    %v946 = vunpack.c.l.b16 %v878
    %v947 = vunpack.c.l.b16 %v879
    %v948 = vunpack.c.l.b16 %v880
    %v949 = vunpack.c.l.b16 %v881
    %v950 = vunpack.c.l.b16 %v882
    %v951 = vunpack.c.l.b16 %v883
    %v952 = vunpack.c.l.b16 %v884
    %v953 = vunpack.c.l.b16 %v885
    %v954 = vpack.c.b16 %v923, %v922
    %v955 = vpack.c.b16 %v925, %v924
    %v956 = vpack.c.b16 %v927, %v926
    %v957 = vpack.c.b16 %v929, %v928
    %v958 = vpack.c.b16 %v931, %v930
    %v959 = vpack.c.b16 %v933, %v932
    %v960 = vpack.c.b16 %v935, %v934
    %v961 = vpack.c.b16 %v937, %v936
    %v962 = vpack.c.b16 %v939, %v938
    %v963 = vpack.c.b16 %v941, %v940
    %v964 = vpack.c.b16 %v943, %v942
    %v965 = vpack.c.b16 %v945, %v944
    %v966 = vpack.c.b16 %v947, %v946
    %v967 = vpack.c.b16 %v949, %v948
    %v968 = vpack.c.b16 %v951, %v950
    %v969 = vpack.c.b16 %v953, %v952
    %986 = vmatprep.subr.bf16.mxu0 0
    %987 = vmatpush1.bf16.msra.mxu0 %v954
    %988 = vmatprep.subr.bf16.mxu0 0
    %989 = vmatpush1.bf16.msra.mxu0 %v955
    %990 = vmatprep.subr.bf16.mxu0 0
    %991 = vmatpush1.bf16.msra.mxu0 %v956
    %992 = vmatprep.subr.bf16.mxu0 0
    %993 = vmatpush1.bf16.msra.mxu0 %v957
    %994 = vmatprep.subr.bf16.mxu0 0
    %995 = vmatpush1.bf16.msra.mxu0 %v958
    %996 = vmatprep.subr.bf16.mxu0 0
    %997 = vmatpush1.bf16.msra.mxu0 %v959
    %998 = vmatprep.subr.bf16.mxu0 0
    %999 = vmatpush1.bf16.msra.mxu0 %v960
    %1000 = vmatprep.subr.bf16.mxu0 0
    %1001 = vmatpush1.bf16.msra.mxu0 %v961
    %1002 = vmatprep.subr.bf16.mxu0 0
    %1003 = vmatpush1.bf16.msra.mxu0 %v962
    %1004 = vmatprep.subr.bf16.mxu0 0
    %1005 = vmatpush1.bf16.msra.mxu0 %v963
    %1006 = vmatprep.subr.bf16.mxu0 0
    %1007 = vmatpush1.bf16.msra.mxu0 %v964
    %1008 = vmatprep.subr.bf16.mxu0 0
    %1009 = vmatpush1.bf16.msra.mxu0 %v965
    %1010 = vmatprep.subr.bf16.mxu0 0
    %1011 = vmatpush1.bf16.msra.mxu0 %v966
    %1012 = vmatprep.subr.bf16.mxu0 0
    %1013 = vmatpush1.bf16.msra.mxu0 %v967
    %1014 = vmatprep.subr.bf16.mxu0 0
    %1015 = vmatpush1.bf16.msra.mxu0 %v968
    %1016 = vmatprep.subr.bf16.mxu0 0
    %1017 = vmatpush1.bf16.msra.mxu0 %v969
    %1018 = vmatprep.mubr.bf16.mxu0 %v853
    %1019 = vmatmul.mubr.bf16.gmra.mrb[0].mxu0 %v852
    %v1020 = vpop.f32.mrb[0].mxu0
    %v1021 = vadd.f32 %v889, %v1020
    %v1022 = vpop.f32.mrb[0].mxu0
    %v1023 = vpop.f32.mrb[0].mxu0
    %v1024 = vpop.f32.mrb[0].mxu0
    %1025 = vdwg.mxu0
    %v1026 = vadd.f32 %v1021, %v699
    %v1027 = vsel %vm675, %v1026, 0.0
    %1028 = vadd.xlane.f32.xlu0 %v1027
    %v1029 = vpop.xlane.xlu0 %1028
    %v1030 = vmul.f32 %v1029, %v679
    %v1031 = vsub.f32 %v1026, %v1030
    %v1032 = vmul.f32 %v1031, %v1031
    %v1033 = vsel %vm675, %v1032, 0.0
    %1034 = vadd.xlane.f32.xlu0 %v1033
    %v1035 = vpop.xlane.xlu0 %1034
    %v1036 = vmul.f32 %v1035, %v679
    %v1037 = vadd.f32 %v1036, 1e-05
    %v1038 = vrsqrt.pop %v1037
    %v1039 = vmul.f32 %v1031, %v1038
    %v1040 = vlaneseq
    %v1041 = vshrl.u32 %v1040, 7
    %v1042 = vsub.s32 4, %v1041
    %v1043 = vrot.slane %v73, %v1042
    %v1044 = vmul.f32 %v1039, %v1043
    %v1045 = vlaneseq
    %v1046 = vshrl.u32 %v1045, 7
    %v1047 = vsub.s32 5, %v1046
    %v1048 = vrot.slane %v73, %v1047
    %v1049 = vadd.f32 %v1044, %v1048
    %1050 = vst [vmem:[#allocation8] sm:$0x3] %v1049
    // Predicated region
    $region50: #{transformer_block_pallas.1} parent=1 // pred_check
      _
    $region51: #{transformer_block_pallas.1} parent=1 // pred_check_branch
      %1052 = sbr.rel (0) target = $region53
    $region52: #{transformer_block_pallas.1} parent=1 // pred_region
      %s1054 = ssub.s32 32, 32
      %1055 = vsyncadd [#allocation4], %s1054
      %s1057 = sshll.u32 [#allocation8], 4
      %s1058 = int_to_ptr.vmem [resolvable:$true] %s1057
      %1060 = dma.vmem_to_hbm [thread:$0]  %s1058, 32, %s9, [#allocation4]
    $region53: #{transformer_block_pallas.1} parent=1 // pred_fallthru
      _
    // Predicated region
    $region54: #{transformer_block_pallas.1} parent=1 // pred_check
      _
    $region55: #{transformer_block_pallas.1} parent=1 // pred_check_branch
      %1062 = sbr.rel (0) target = $region57
    $region56: #{transformer_block_pallas.1} parent=1 // pred_region
      %1063 = dma.done [#allocation4], 32
    $region57: #{transformer_block_pallas.1} parent=1 // pred_fallthru
      _
    %1064 = vsyncpa [#allocation3], 1
    %1065 = vsyncpa [#allocation6], 1
    %1066 = vsyncpa [#allocation4], 1

</llo_original>
